<compile_context>
chip_gen: v7x
topology: tpu7x:2x2x1
jax: 0.10.0
libtpu: 0.0.40
codegen_flags: <defaults>
</compile_context>

<pallas_src>
import functools

import jax
import jax.numpy as jnp
from jax.experimental import pallas as pl
from jax.experimental.pallas import tpu as pltpu

_NEG_INF = -1e30
_LANE = 128
_SUBLANE = 8


def _round_up(n, m):
    return ((n + m - 1) // m) * m


def _cdiv(a, b):
    return (a + b - 1) // b


def _choose_tile(b_ceil, block_b):
    """Lane-aligned batch tile; >=2 tiles when possible so v7x megacore splits."""
    tb = min(block_b, b_ceil)
    n = _cdiv(b_ceil, tb)
    if b_ceil >= 2 * _LANE:
        n = max(n, 2)                      # keep both v7x TensorCores busy
    return _round_up(_cdiv(b_ceil, n), _LANE)


def policy_net_kernel(xT_ref, w1_ref, b1_ref, w2_ref, b2_ref, outT_ref):
    # ---- fc1: hT = relu(W1 @ xT + b1); W1 is PyTorch-layout [H, S] ----------
    hT = jnp.dot(w1_ref[...], xT_ref[...],
                 preferred_element_type=jnp.float32)          # [H, TB]
    hT = jnp.maximum(hT + b1_ref[...], 0.0)                   # b1: [H, 1]

    # ---- fc2: logitsT = W2_pad @ hT + b2_pad; padded rows get -1e30 bias ----
    logitsT = jnp.dot(w2_ref[...], hT,
                      preferred_element_type=jnp.float32)     # [A_pad, TB]
    logitsT = logitsT + b2_ref[...]                           # b2: [A_pad, 1]

    # ---- softmax over the action (sublane) axis == PyTorch dim=1 ------------
    m = jnp.max(logitsT, axis=0, keepdims=True)               # real rows dominate
    e = jnp.exp(logitsT - m)                                  # padded rows -> 0
    denom = jnp.sum(e, axis=0, keepdims=True)
    outT_ref[...] = e / denom                 # exact divide: rows sum to 1 (f32)


def prepare_params(w1, b1, w2, b2):
    """One-time weight prep (hoisted out of the per-step path).

    w1: [H, S], b1: [H], w2: [A, H], b2: [A]   (PyTorch nn.Linear layout).
    Returns kernel-ready arrays with the action dim padded to a sublane
    multiple (8) using zero weights and -1e30 bias on padded rows.
    """
    hidden_dim, _ = w1.shape
    action_dim = w2.shape[0]
    a_pad = _round_up(action_dim, _SUBLANE)

    w1k = jnp.asarray(w1, jnp.float32)                                   # [H, S]
    b1k = jnp.asarray(b1, jnp.float32).reshape(hidden_dim, 1)            # [H, 1]
    w2k = jnp.zeros((a_pad, hidden_dim), jnp.float32).at[:action_dim].set(
        jnp.asarray(w2, jnp.float32))                                    # [A_pad, H]
    b2k = jnp.full((a_pad, 1), _NEG_INF, jnp.float32).at[:action_dim, 0].set(
        jnp.asarray(b2, jnp.float32))                                    # [A_pad, 1]
    return w1k, b1k, w2k, b2k, action_dim


def policy_net_forward(x, w1, b1, w2_pad, b2_pad, *, action_dim, block_b=2048):
    """x: [B, S]; w1: [H, S]; b1: [H, 1]; w2_pad: [A_pad, H]; b2_pad: [A_pad, 1]."""
    batch, state_dim = x.shape
    hidden_dim = w1.shape[0]
    a_pad = w2_pad.shape[0]

    # Batch goes on the lane axis: transpose x once (small [S, B] copy) so
    # every compute/store tile is [A_pad sublanes x TB lanes].
    xT = jnp.transpose(x.astype(jnp.float32))                 # [S, B]

    b_ceil = _round_up(batch, _LANE)
    tb = _choose_tile(b_ceil, block_b)
    b_pad = _round_up(b_ceil, tb)
    if b_pad != batch:
        xT = jnp.pad(xT, ((0, 0), (0, b_pad - batch)))
    grid = (b_pad // tb,)

    flops = 2 * b_pad * (state_dim * hidden_dim + hidden_dim * a_pad)
    bytes_accessed = 4 * (state_dim * b_pad + hidden_dim * state_dim + hidden_dim
                          + a_pad * hidden_dim + a_pad + a_pad * b_pad)

    outT = pl.pallas_call(
        policy_net_kernel,
        out_shape=jax.ShapeDtypeStruct((a_pad, b_pad), jnp.float32),
        grid=grid,
        in_specs=[
            pl.BlockSpec((state_dim, tb), lambda i: (0, i)),       # activations stream
            pl.BlockSpec((hidden_dim, state_dim), lambda i: (0, 0)),  # resident weights
            pl.BlockSpec((hidden_dim, 1), lambda i: (0, 0)),
            pl.BlockSpec((a_pad, hidden_dim), lambda i: (0, 0)),
            pl.BlockSpec((a_pad, 1), lambda i: (0, 0)),
        ],
        out_specs=pl.BlockSpec((a_pad, tb), lambda i: (0, i)),
        compiler_params=pltpu.CompilerParams(
            dimension_semantics=("parallel",)),
        cost_estimate=pl.CostEstimate(
            flops=flops,
            transcendentals=b_pad * a_pad,
            bytes_accessed=bytes_accessed),
    )(xT, w1, b1, w2_pad, b2_pad)

    # Strip action/batch padding and return the PyTorch layout [B, A] (tiny).
    return jnp.transpose(outT[:action_dim, :batch])


def init_params(key, state_dim, hidden_dim, action_dim):
    """PyTorch nn.Linear init: U(-1/sqrt(fan_in), +1/sqrt(fan_in)), [out, in]."""
    k1, k2, k3, k4 = jax.random.split(key, 4)
    bound1 = 1.0 / float(state_dim) ** 0.5
    bound2 = 1.0 / float(hidden_dim) ** 0.5
    w1 = jax.random.uniform(k1, (hidden_dim, state_dim), jnp.float32, -bound1, bound1)
    b1 = jax.random.uniform(k2, (hidden_dim,), jnp.float32, -bound1, bound1)
    w2 = jax.random.uniform(k3, (action_dim, hidden_dim), jnp.float32, -bound2, bound2)
    b2 = jax.random.uniform(k4, (action_dim,), jnp.float32, -bound2, bound2)
    return w1, b1, w2, b2


if __name__ == "__main__":
    # Small shapes consistent with the module: x is [batch, state_dim].
    batch, state_dim, hidden_dim, action_dim = 8, 16, 32, 4

    key = jax.random.PRNGKey(0)
    kx, kp = jax.random.split(key)
    x = jax.random.normal(kx, (batch, state_dim), jnp.float32)
    w1, b1, w2, b2 = init_params(kp, state_dim, hidden_dim, action_dim)

    # One-time weight prep, kept outside the jitted per-step path.
    w1k, b1k, w2k, b2k, _ = prepare_params(w1, b1, w2, b2)

    fwd = jax.jit(functools.partial(policy_net_forward, action_dim=action_dim))
    out = jax.block_until_ready(fwd(x, w1k, b1k, w2k, b2k))

    # Sanity check against plain-JAX reference.
    h_ref = jnp.maximum(x @ w1.T + b1, 0.0)
    ref = jax.nn.softmax(h_ref @ w2.T + b2, axis=1)
    assert out.shape == (batch, action_dim)
    assert jnp.allclose(out, ref, atol=1e-3, rtol=1e-3)
    assert jnp.allclose(jnp.sum(out, axis=1), 1.0, atol=1e-3)

    print("KERNEL_OK")
</pallas_src>

<mosaic_0001>
module attributes {stable_mosaic.version = 11 : i64} {
  func.func @policy_net_kernel(%arg0: i32, %arg1: memref<16x128xf32, #tpu.memory_space<vmem>>, %arg2: memref<32x16xf32, #tpu.memory_space<vmem>>, %arg3: memref<32x1xf32, #tpu.memory_space<vmem>>, %arg4: memref<8x32xf32, #tpu.memory_space<vmem>>, %arg5: memref<8x1xf32, #tpu.memory_space<vmem>>, %arg6: memref<8x128xf32, #tpu.memory_space<vmem>>) attributes {dimension_semantics = [#tpu.dimension_semantics<parallel>], iteration_bounds = array<i64: 1>, scalar_prefetch = 0 : i64, scratch_operands = 0 : i64, tpu.core_type = #tpu.core_type<tc>, window_params = [{transform_indices = @transform_0, window_bounds = array<i64: 16, 128>}, {pipeline_mode = #tpu.pipeline_mode<synchronous>, transform_indices = @transform_1, window_bounds = array<i64: 32, 16>}, {pipeline_mode = #tpu.pipeline_mode<synchronous>, transform_indices = @transform_2, window_bounds = array<i64: 32, 1>}, {pipeline_mode = #tpu.pipeline_mode<synchronous>, transform_indices = @transform_3, window_bounds = array<i64: 8, 32>}, {pipeline_mode = #tpu.pipeline_mode<synchronous>, transform_indices = @transform_4, window_bounds = array<i64: 8, 1>}, {transform_indices = @transform_5, window_bounds = array<i64: 8, 128>}]} {
    %c0 = arith.constant 0 : index
    %c0_0 = arith.constant 0 : index
    %0 = vector.load %arg2[%c0, %c0_0] : memref<32x16xf32, #tpu.memory_space<vmem>>, vector<32x16xf32>
    %c0_1 = arith.constant 0 : index
    %c0_2 = arith.constant 0 : index
    %1 = vector.load %arg1[%c0_1, %c0_2] : memref<16x128xf32, #tpu.memory_space<vmem>>, vector<16x128xf32>
    %cst = arith.constant dense<0.000000e+00> : vector<32x128xf32>
    %2 = tpu.matmul %0, %1, %cst {dimension_numbers = #tpu.dot_dimension_numbers<[1], [0], [0], [1], [0, 0, 1, 1], [], []>} : vector<32x16xf32>, vector<16x128xf32>, vector<32x128xf32> -> vector<32x128xf32>
    %c0_3 = arith.constant 0 : index
    %c0_4 = arith.constant 0 : index
    %3 = vector.load %arg3[%c0_3, %c0_4] : memref<32x1xf32, #tpu.memory_space<vmem>>, vector<32x1xf32>
    %4 = vector.broadcast %3 : vector<32x1xf32> to vector<32x128xf32>
    %5 = arith.addf %2, %4 : vector<32x128xf32>
    %cst_5 = arith.constant 0.000000e+00 : f32
    %6 = vector.broadcast %cst_5 : f32 to vector<32x128xf32>
    %7 = arith.maximumf %5, %6 : vector<32x128xf32>
    %c0_6 = arith.constant 0 : index
    %c0_7 = arith.constant 0 : index
    %8 = vector.load %arg4[%c0_6, %c0_7] : memref<8x32xf32, #tpu.memory_space<vmem>>, vector<8x32xf32>
    %cst_8 = arith.constant dense<0.000000e+00> : vector<8x128xf32>
    %9 = tpu.matmul %8, %7, %cst_8 {dimension_numbers = #tpu.dot_dimension_numbers<[1], [0], [0], [1], [0, 0, 1, 1], [], []>} : vector<8x32xf32>, vector<32x128xf32>, vector<8x128xf32> -> vector<8x128xf32>
    %c0_9 = arith.constant 0 : index
    %c0_10 = arith.constant 0 : index
    %10 = vector.load %arg5[%c0_9, %c0_10] : memref<8x1xf32, #tpu.memory_space<vmem>>, vector<8x1xf32>
    %11 = vector.broadcast %10 : vector<8x1xf32> to vector<8x128xf32>
    %12 = arith.addf %9, %11 : vector<8x128xf32>
    %cst_11 = arith.constant dense<0xFF800000> : vector<128xf32>
    %13 = vector.multi_reduction <maximumf>, %12, %cst_11 [0] : vector<8x128xf32> to vector<128xf32>
    %14 = vector.shape_cast %13 : vector<128xf32> to vector<1x128xf32>
    %15 = vector.broadcast %14 : vector<1x128xf32> to vector<8x128xf32>
    %16 = arith.subf %12, %15 : vector<8x128xf32>
    %17 = math.exp %16 : vector<8x128xf32>
    %cst_12 = arith.constant dense<0.000000e+00> : vector<128xf32>
    %18 = vector.multi_reduction <add>, %17, %cst_12 [0] : vector<8x128xf32> to vector<128xf32>
    %19 = vector.shape_cast %18 : vector<128xf32> to vector<1x128xf32>
    %20 = vector.broadcast %19 : vector<1x128xf32> to vector<8x128xf32>
    %21 = arith.divf %17, %20 : vector<8x128xf32>
    %c0_13 = arith.constant 0 : index
    %c0_14 = arith.constant 0 : index
    %22 = vector.load %arg6[%c0_13, %c0_14] : memref<8x128xf32, #tpu.memory_space<vmem>>, vector<8x128xf32>
    tpu.vector_store %arg6[%c0_13, %c0_14], %21 {strides = array<i32>} : memref<8x128xf32, #tpu.memory_space<vmem>>, vector<8x128xf32>,
    return
  }
  func.func @transform_0(%arg0: i32) -> (i32, i32) {
    %c0_i32 = arith.constant 0 : i32
    %c0_i32_0 = arith.constant 0 : i32
    return %c0_i32, %arg0 : i32, i32
  }
  func.func @transform_1(%arg0: i32) -> (i32, i32) {
    %c0_i32 = arith.constant 0 : i32
    %c0_i32_0 = arith.constant 0 : i32
    %c0_i32_1 = arith.constant 0 : i32
    return %c0_i32, %c0_i32_0 : i32, i32
  }
  func.func @transform_2(%arg0: i32) -> (i32, i32) {
    %c0_i32 = arith.constant 0 : i32
    %c0_i32_0 = arith.constant 0 : i32
    %c0_i32_1 = arith.constant 0 : i32
    return %c0_i32, %c0_i32_0 : i32, i32
  }
  func.func @transform_3(%arg0: i32) -> (i32, i32) {
    %c0_i32 = arith.constant 0 : i32
    %c0_i32_0 = arith.constant 0 : i32
    %c0_i32_1 = arith.constant 0 : i32
    return %c0_i32, %c0_i32_0 : i32, i32
  }
  func.func @transform_4(%arg0: i32) -> (i32, i32) {
    %c0_i32 = arith.constant 0 : i32
    %c0_i32_0 = arith.constant 0 : i32
    %c0_i32_1 = arith.constant 0 : i32
    return %c0_i32, %c0_i32_0 : i32, i32
  }
  func.func @transform_5(%arg0: i32) -> (i32, i32) {
    %c0_i32 = arith.constant 0 : i32
    %c0_i32_0 = arith.constant 0 : i32
    return %c0_i32, %arg0 : i32, i32
  }
}

</mosaic_0001>

<llo_original>
// kernel: policy_net_forward.1
$region0: #{policy_net_forward.1}
  #allocation0 [shape = 'u32[]', space=smem, size = 0x4, offset = 0x4, fixed_abs, tag = 'smem constant byte address 0x4 - core index']
  #allocation1 [shape = 'u32[144,128]{1,0:T(1,128)}', space=vmem, size = 0x12000, scoped, tag = 'internal scratch']
  %s0 = inlined_call_operand.vmem [shape: f32[16,128], index: 0, kind: input, shape index: {}]
  %s1 = inlined_call_operand.vmem [shape: f32[32,16], index: 1, kind: input, shape index: {}]
  %s2 = inlined_call_operand.vmem [shape: f32[32,1], index: 2, kind: input, shape index: {}]
  %s3 = inlined_call_operand.vmem [shape: f32[8,32], index: 3, kind: input, shape index: {}]
  %s4 = inlined_call_operand.vmem [shape: f32[8,1], index: 4, kind: input, shape index: {}]
  %s5 = inlined_call_operand.vmem [shape: f32[8,128], index: 5, kind: output, shape index: {}]
  %s6 = sld [smem:[#allocation0]]
  $region30: #{policy_net_forward.1} parent=0
    _
  %s8 = ssub.s32 1, %s6
  %s9 = scalar_select 0, %s8, %s6
  // Predicated region
  $region2: #{policy_net_forward.1} parent=0 // pred_check
    _
  $region3: #{policy_net_forward.1} parent=0 // pred_check_branch
    %11 = sbr.rel (0) target = $region5
  $region4: #{policy_net_forward.1} parent=0 // pred_region
    _
  $region5: #{policy_net_forward.1} parent=0 // pred_fallthru
    _
  // Predicated region
  $region6: #{policy_net_forward.1} parent=0 // pred_check
    _
  $region7: #{policy_net_forward.1} parent=0 // pred_check_branch
    %13 = sbr.rel (0) target = $region9
  $region8: #{policy_net_forward.1} parent=0 // pred_region
    _
  $region9: #{policy_net_forward.1} parent=0 // pred_fallthru
    _
  // Predicated region
  $region10: #{policy_net_forward.1} parent=0 // pred_check
    _
  $region11: #{policy_net_forward.1} parent=0 // pred_check_branch
    %15 = sbr.rel (0) target = $region13
  $region12: #{policy_net_forward.1} parent=0 // pred_region
    _
  $region13: #{policy_net_forward.1} parent=0 // pred_fallthru
    _
  // Predicated region
  $region14: #{policy_net_forward.1} parent=0 // pred_check
    _
  $region15: #{policy_net_forward.1} parent=0 // pred_check_branch
    %17 = sbr.rel (0) target = $region17
  $region16: #{policy_net_forward.1} parent=0 // pred_region
    _
  $region17: #{policy_net_forward.1} parent=0 // pred_fallthru
    _
  // Predicated region
  $region18: #{policy_net_forward.1} parent=0 // pred_check
    _
  $region19: #{policy_net_forward.1} parent=0 // pred_check_branch
    %19 = sbr.rel (0) target = $region21
  $region20: #{policy_net_forward.1} parent=0 // pred_region
    _
  $region21: #{policy_net_forward.1} parent=0 // pred_fallthru
    _
  %v20 = vld [vmem:[%s1] sm:$0xff]
  %v21 = vld [vmem:[%s1 + $0x8] sm:$0xff]
  %v22 = vld [vmem:[%s1 + $0x10] sm:$0xff]
  %v23 = vld [vmem:[%s1 + $0x18] sm:$0xff]
  %v24 = vld [vmem:[%s0] sm:$0xff]
  %v25 = vld [vmem:[%s0 + $0x8] sm:$0xff]
  %v26 = vld [vmem:[%s2] sm:$0xff]
  %v27 = vld [vmem:[%s2 + $0x8] sm:$0xff]
  %v28 = vld [vmem:[%s2 + $0x10] sm:$0xff]
  %v29 = vld [vmem:[%s2 + $0x18] sm:$0xff]
  %31 = vset.pattern.permute.xlu0 0
  %32 = vperm.xlu0 %31, %v26
  %v33 = vpop.permute.xlu0 %32
  %36 = vset.pattern.permute.xlu0 0
  %37 = vperm.xlu0 %36, %v27
  %v38 = vpop.permute.xlu0 %37
  %41 = vset.pattern.permute.xlu0 0
  %42 = vperm.xlu0 %41, %v28
  %v43 = vpop.permute.xlu0 %42
  %46 = vset.pattern.permute.xlu0 0
  %47 = vperm.xlu0 %46, %v29
  %v48 = vpop.permute.xlu0 %47
  %vm50 = vcmask 130048
  %v52 = vsel %vm50, %v20, 0
  %v55 = vsel %vm50, %v21, 0
  %v58 = vsel %vm50, %v22, 0
  %v61 = vsel %vm50, %v23, 0
  %63 = vmatprep.subr.mxu0 0.0
  %64 = vmatpush1.msra.mxu0 %v24
  %65 = vmatprep.subr.mxu0 0.0
  %66 = vmatpush1.msra.mxu0 %v25
  %67 = vmatprep.subr.mxu0 0.0
  %68 = vmatpush1.msra.mxu0 0.0
  %69 = vmatprep.subr.mxu0 0.0
  %70 = vmatpush1.msra.mxu0 0.0
  %71 = vmatprep.subr.mxu0 0.0
  %72 = vmatpush1.msra.mxu0 0.0
  %73 = vmatprep.subr.mxu0 0.0
  %74 = vmatpush1.msra.mxu0 0.0
  %75 = vmatprep.subr.mxu0 0.0
  %76 = vmatpush1.msra.mxu0 0.0
  %77 = vmatprep.subr.mxu0 0.0
  %78 = vmatpush1.msra.mxu0 0.0
  %79 = vmatprep.subr.mxu0 0.0
  %80 = vmatpush1.msra.mxu0 0.0
  %81 = vmatprep.subr.mxu0 0.0
  %82 = vmatpush1.msra.mxu0 0.0
  %83 = vmatprep.subr.mxu0 0.0
  %84 = vmatpush1.msra.mxu0 0.0
  %85 = vmatprep.subr.mxu0 0.0
  %86 = vmatpush1.msra.mxu0 0.0
  %87 = vmatprep.subr.mxu0 0.0
  %88 = vmatpush1.msra.mxu0 0.0
  %89 = vmatprep.subr.mxu0 0.0
  %90 = vmatpush1.msra.mxu0 0.0
  %91 = vmatprep.subr.mxu0 0.0
  %92 = vmatpush1.msra.mxu0 0.0
  %93 = vmatprep.subr.mxu0 0.0
  %94 = vmatpush1.msra.mxu0 0.0
  %95 = vmatprep.subr.mxu0 0.0
  %96 = vmatpush1.msra.mxu0 0.0
  %97 = vmatprep.subr.mxu0 0.0
  %98 = vmatpush1.msra.mxu0 0.0
  %99 = vmatprep.subr.mxu0 0.0
  %100 = vmatpush1.msra.mxu0 0.0
  %101 = vmatprep.subr.mxu0 0.0
  %102 = vmatpush1.msra.mxu0 0.0
  %103 = vmatprep.subr.mxu0 0.0
  %104 = vmatpush1.msra.mxu0 0.0
  %105 = vmatprep.subr.mxu0 0.0
  %106 = vmatpush1.msra.mxu0 0.0
  %107 = vmatprep.subr.mxu0 0.0
  %108 = vmatpush1.msra.mxu0 0.0
  %109 = vmatprep.subr.mxu0 0.0
  %110 = vmatpush1.msra.mxu0 0.0
  %111 = vmatprep.subr.mxu0 0.0
  %112 = vmatpush1.msra.mxu0 0.0
  %113 = vmatprep.subr.mxu0 0.0
  %114 = vmatpush1.msra.mxu0 0.0
  %115 = vmatprep.subr.mxu0 0.0
  %116 = vmatpush1.msra.mxu0 0.0
  %117 = vmatprep.subr.mxu0 0.0
  %118 = vmatpush1.msra.mxu0 0.0
  %119 = vmatprep.subr.mxu0 0.0
  %120 = vmatpush1.msra.mxu0 0.0
  %121 = vmatprep.subr.mxu0 0.0
  %122 = vmatpush1.msra.mxu0 0.0
  %123 = vmatprep.subr.mxu0 0.0
  %124 = vmatpush1.msra.mxu0 0.0
  %125 = vmatprep.subr.mxu0 0.0
  %126 = vmatpush1.msra.mxu0 0.0
  %127 = vmatprep.mubr.f32.mxu0 0.0
  %128 = vmatmul.mubr.f32.gmra.mrb[0].mxu0 %v52
  %v129 = vpop.f32.mrb[0].mxu0
  %v130 = vadd.f32 %v33, %v129
  %v131 = vpop.f32.mrb[0].mxu0
  %132 = vmatprep.mubr.f32.mxu0 0.0
  %133 = vmatmul.mubr.f32.gmra.mrb[0].mxu0 %v55
  %v134 = vpop.f32.mrb[0].mxu0
  %v135 = vadd.f32 %v38, %v134
  %v136 = vpop.f32.mrb[0].mxu0
  %137 = vmatprep.mubr.f32.mxu0 0.0
  %138 = vmatmul.mubr.f32.gmra.mrb[0].mxu0 %v58
  %v139 = vpop.f32.mrb[0].mxu0
  %v140 = vadd.f32 %v43, %v139
  %v141 = vpop.f32.mrb[0].mxu0
  %142 = vmatprep.mubr.f32.mxu0 0.0
  %143 = vmatmul.mubr.f32.gmra.mrb[0].mxu0 %v61
  %v144 = vpop.f32.mrb[0].mxu0
  %v145 = vadd.f32 %v48, %v144
  %v146 = vpop.f32.mrb[0].mxu0
  %147 = vdwg.mxu0
  %v148 = vmax.f32 %v130, 0.0
  %v149 = vmax.f32 %v135, 0.0
  %v150 = vmax.f32 %v140, 0.0
  %v151 = vmax.f32 %v145, 0.0
  %v152 = vld [vmem:[%s3] sm:$0xff]
  %v153 = vld [vmem:[%s4] sm:$0xff]
  %155 = vset.pattern.permute.xlu0 0
  %156 = vperm.xlu0 %155, %v153
  %v157 = vpop.permute.xlu0 %156
  %vm159 = vcmask 261120
  %v161 = vsel %vm159, %v152, 0
  %163 = vmatprep.subr.mxu0 0.0
  %164 = vmatpush1.msra.mxu0 %v148
  %165 = vmatprep.subr.mxu0 0.0
  %166 = vmatpush1.msra.mxu0 %v149
  %167 = vmatprep.subr.mxu0 0.0
  %168 = vmatpush1.msra.mxu0 %v150
  %169 = vmatprep.subr.mxu0 0.0
  %170 = vmatpush1.msra.mxu0 %v151
  %171 = vmatprep.subr.mxu0 0.0
  %172 = vmatpush1.msra.mxu0 0.0
  %173 = vmatprep.subr.mxu0 0.0
  %174 = vmatpush1.msra.mxu0 0.0
  %175 = vmatprep.subr.mxu0 0.0
  %176 = vmatpush1.msra.mxu0 0.0
  %177 = vmatprep.subr.mxu0 0.0
  %178 = vmatpush1.msra.mxu0 0.0
  %179 = vmatprep.subr.mxu0 0.0
  %180 = vmatpush1.msra.mxu0 0.0
  %181 = vmatprep.subr.mxu0 0.0
  %182 = vmatpush1.msra.mxu0 0.0
  %183 = vmatprep.subr.mxu0 0.0
  %184 = vmatpush1.msra.mxu0 0.0
  %185 = vmatprep.subr.mxu0 0.0
  %186 = vmatpush1.msra.mxu0 0.0
  %187 = vmatprep.subr.mxu0 0.0
  %188 = vmatpush1.msra.mxu0 0.0
  %189 = vmatprep.subr.mxu0 0.0
  %190 = vmatpush1.msra.mxu0 0.0
  %191 = vmatprep.subr.mxu0 0.0
  %192 = vmatpush1.msra.mxu0 0.0
  %193 = vmatprep.subr.mxu0 0.0
  %194 = vmatpush1.msra.mxu0 0.0
  %195 = vmatprep.subr.mxu0 0.0
  %196 = vmatpush1.msra.mxu0 0.0
  %197 = vmatprep.subr.mxu0 0.0
  %198 = vmatpush1.msra.mxu0 0.0
  %199 = vmatprep.subr.mxu0 0.0
  %200 = vmatpush1.msra.mxu0 0.0
  %201 = vmatprep.subr.mxu0 0.0
  %202 = vmatpush1.msra.mxu0 0.0
  %203 = vmatprep.subr.mxu0 0.0
  %204 = vmatpush1.msra.mxu0 0.0
  %205 = vmatprep.subr.mxu0 0.0
  %206 = vmatpush1.msra.mxu0 0.0
  %207 = vmatprep.subr.mxu0 0.0
  %208 = vmatpush1.msra.mxu0 0.0
  %209 = vmatprep.subr.mxu0 0.0
  %210 = vmatpush1.msra.mxu0 0.0
  %211 = vmatprep.subr.mxu0 0.0
  %212 = vmatpush1.msra.mxu0 0.0
  %213 = vmatprep.subr.mxu0 0.0
  %214 = vmatpush1.msra.mxu0 0.0
  %215 = vmatprep.subr.mxu0 0.0
  %216 = vmatpush1.msra.mxu0 0.0
  %217 = vmatprep.subr.mxu0 0.0
  %218 = vmatpush1.msra.mxu0 0.0
  %219 = vmatprep.subr.mxu0 0.0
  %220 = vmatpush1.msra.mxu0 0.0
  %221 = vmatprep.subr.mxu0 0.0
  %222 = vmatpush1.msra.mxu0 0.0
  %223 = vmatprep.subr.mxu0 0.0
  %224 = vmatpush1.msra.mxu0 0.0
  %225 = vmatprep.subr.mxu0 0.0
  %226 = vmatpush1.msra.mxu0 0.0
  %227 = vmatprep.mubr.f32.mxu0 0.0
  %228 = vmatmul.mubr.f32.gmra.mrb[0].mxu0 %v161
  %v229 = vpop.f32.mrb[0].mxu0
  %v230 = vadd.f32 %v157, %v229
  %v231 = vpop.f32.mrb[0].mxu0
  %232 = vdwg.mxu0
  %v233 = vrot.slane %v230, 4
  %v234 = vmax.f32 %v230, %v233
  %v235 = vrot.slane %v234, 2
  %v236 = vmax.f32 %v234, %v235
  %v237 = vrot.slane %v236, 1
  %v238 = vmax.f32 %v236, %v237
  %v239 = vsub.f32 %v230, %v238
  %v240 = vmul.f32 %v239, 1.442695
  %v241 = vpow.pop %v240
  %v242 = vrot.slane %v241, 4
  %v243 = vadd.f32 %v241, %v242
  %v244 = vrot.slane %v243, 2
  %v245 = vadd.f32 %v243, %v244
  %v246 = vrot.slane %v245, 1
  %v247 = vadd.f32 %v245, %v246
  %v248 = vrcp.pop %v247
  %v249 = vmul.f32 %v241, %v248
  %250 = vst [vmem:[%s5] sm:$0xff] %v249
  // Predicated region
  $region22: #{policy_net_forward.1} parent=0 // pred_check
    _
  $region23: #{policy_net_forward.1} parent=0 // pred_check_branch
    %252 = sbr.rel (0) target = $region25
  $region24: #{policy_net_forward.1} parent=0 // pred_region
    _
  $region25: #{policy_net_forward.1} parent=0 // pred_fallthru
    _
  // Predicated region
  $region26: #{policy_net_forward.1} parent=0 // pred_check
    _
  $region27: #{policy_net_forward.1} parent=0 // pred_check_branch
    %254 = sbr.rel (0) target = $region29
  $region28: #{policy_net_forward.1} parent=0 // pred_region
    _
  $region29: #{policy_net_forward.1} parent=0 // pred_fallthru
    _

</llo_original>
